<compile_context>
chip_gen: v5e
topology: v5e:2x2
jax: 0.10.0
libtpu: 0.0.40
codegen_flags: <defaults>
</compile_context>

<pallas_src>
import functools

import jax
import jax.numpy as jnp
from jax.experimental import pallas as pl
from jax.experimental.pallas import tpu as pltpu


def _rows_on_sublanes_kernel(x_ref, a_ref, b_ref, o_ref, *, d_model, eps):
    """x_ref: (TR, D) -- rows on sublanes, features on lanes (used when D >= 128)."""
    x = x_ref[...].astype(jnp.float32)
    mean = jnp.mean(x, axis=-1, keepdims=True)                # (TR, 1)
    diff = x - mean
    # torch.std default: unbiased estimator (divide by D-1).
    var = jnp.sum(diff * diff, axis=-1, keepdims=True) * (1.0 / (d_model - 1))
    inv = pl.reciprocal(jnp.sqrt(var) + eps, approx=False)    # (TR, 1), EUP slot
    a = a_ref[...].astype(jnp.float32)                        # (1, D)
    b = b_ref[...].astype(jnp.float32)                        # (1, D)
    o_ref[...] = (diff * inv * a + b).astype(o_ref.dtype)


def _rows_on_lanes_kernel(x_ref, a_ref, b_ref, o_ref, *, d_model, eps):
    """x_ref: (D, TC) -- features on sublanes, rows on lanes (used when D < 128)."""
    x = x_ref[...].astype(jnp.float32)
    mean = jnp.mean(x, axis=0, keepdims=True)                 # (1, TC)
    diff = x - mean
    var = jnp.sum(diff * diff, axis=0, keepdims=True) * (1.0 / (d_model - 1))
    inv = pl.reciprocal(jnp.sqrt(var) + eps, approx=False)    # (1, TC)
    a = a_ref[...].astype(jnp.float32)                        # (D, 1)
    b = b_ref[...].astype(jnp.float32)                        # (D, 1)
    o_ref[...] = (diff * inv * a + b).astype(o_ref.dtype)


def _round_up(n: int, m: int) -> int:
    return ((n + m - 1) // m) * m


# ~3 MiB per pipeline buffer: 2 input + 2 output buffers => ~12 MiB live VMEM,
# inside v5e's 16 MiB scoped default and well inside v6e/v7x budgets.
_TARGET_TILE_BYTES = 3 * 1024 * 1024


def layer_norm(x, a, b, eps=1e-6):
    """x: (..., D) float32/bfloat16; a, b: (D,). Matches the PyTorch module."""
    orig_shape = x.shape
    d_model = int(orig_shape[-1])
    if d_model < 2:
        raise ValueError("d_model must be >= 2 (unbiased std divides by d_model - 1)")

    rows = 1
    for s in orig_shape[:-1]:
        rows *= int(s)
    x2d = x.reshape(rows, d_model)
    itemsize = jnp.dtype(x.dtype).itemsize

    compiler_params = pltpu.CompilerParams(
        # Rows are independent -> shard the 1-D grid across both v7x
        # TensorCores (no-op on v5e/v6e). If profiling ever shows a single-TC
        # walk on v7x, switch this axis to pltpu.CORE_PARALLEL.
        dimension_semantics=("parallel",),
    )

    if d_model >= 128:
        # Features already fill the 128-lane axis: tile rows over sublanes.
        sub = 8 * max(1, 4 // itemsize)                       # f32: 8, bf16: 16
        tr = max(sub, (_TARGET_TILE_BYTES // (itemsize * d_model)) // sub * sub)
        tr = min(tr, _round_up(rows, sub))
        out = pl.pallas_call(
            functools.partial(_rows_on_sublanes_kernel, d_model=d_model, eps=eps),
            out_shape=jax.ShapeDtypeStruct((rows, d_model), x.dtype),
            grid=(pl.cdiv(rows, tr),),
            in_specs=[
                pl.BlockSpec((tr, d_model), lambda i: (i, 0)),   # x: row tiles
                pl.BlockSpec((1, d_model), lambda i: (0, 0)),    # a: resident
                pl.BlockSpec((1, d_model), lambda i: (0, 0)),    # b: resident
            ],
            out_specs=pl.BlockSpec((tr, d_model), lambda i: (i, 0)),
            compiler_params=compiler_params,
        )(x2d, a.reshape(1, d_model), b.reshape(1, d_model))
        return out.reshape(orig_shape)

    # Small feature dim (< 128 lanes): lane-dense layout. Put rows on the
    # 128-lane axis and reduce D over sublanes so stores are full-width vst
    # rather than masked partial stores (the dominant lever at D << 128).
    x_t = x2d.T                                               # (D, rows)
    tc = max(128, (_TARGET_TILE_BYTES // (itemsize * d_model)) // 128 * 128)
    tc = min(tc, _round_up(rows, 128))
    out_t = pl.pallas_call(
        functools.partial(_rows_on_lanes_kernel, d_model=d_model, eps=eps),
        out_shape=jax.ShapeDtypeStruct((d_model, rows), x.dtype),
        grid=(pl.cdiv(rows, tc),),
        in_specs=[
            pl.BlockSpec((d_model, tc), lambda i: (0, i)),       # x^T: column tiles
            pl.BlockSpec((d_model, 1), lambda i: (0, 0)),        # a: resident
            pl.BlockSpec((d_model, 1), lambda i: (0, 0)),        # b: resident
        ],
        out_specs=pl.BlockSpec((d_model, tc), lambda i: (0, i)),
        compiler_params=compiler_params,
    )(x_t, a.reshape(d_model, 1), b.reshape(d_model, 1))
    return out_t.T.reshape(orig_shape)


def _reference(x, a, b, eps):
    d = x.shape[-1]
    mean = jnp.mean(x, axis=-1, keepdims=True)
    std = jnp.sqrt(jnp.sum((x - mean) ** 2, axis=-1, keepdims=True) / (d - 1))
    return a * (x - mean) / (std + eps) + b


if __name__ == "__main__":
    eps = 1e-6
    key = jax.random.PRNGKey(0)
    k1, k2 = jax.random.split(key)

    # Shape from the reference module: x = torch.ones(4, 5, 20) -> d_model = 20.
    B, S, D = 4, 5, 20
    x = jax.random.normal(k1, (B, S, D), dtype=jnp.float32)
    a = jnp.ones((D,), dtype=jnp.float32)    # nn.Parameter(torch.ones(d_model))
    b = jnp.zeros((D,), dtype=jnp.float32)   # nn.Parameter(torch.zeros(d_model))

    out = jax.block_until_ready(layer_norm(x, a, b, eps))
    ref = _reference(x, a, b, eps)
    assert jnp.allclose(out, ref, atol=1e-5, rtol=1e-5), "mismatch (D=20, lane-dense path)"

    # Also exercise the D >= 128 row-major path with a ragged row count
    # (rows=18, not a multiple of the tile) to cover the masked trailing block.
    D2 = 256
    x2 = jax.random.normal(k2, (2, 9, D2), dtype=jnp.float32)
    a2 = jnp.full((D2,), 1.5, dtype=jnp.float32)
    b2 = jnp.full((D2,), 0.25, dtype=jnp.float32)
    out2 = jax.block_until_ready(layer_norm(x2, a2, b2, eps))
    ref2 = _reference(x2, a2, b2, eps)
    assert jnp.allclose(out2, ref2, atol=1e-5, rtol=1e-5), "mismatch (D=256, row-major path)"

    print("KERNEL_OK")
</pallas_src>

<mosaic_0001>
module attributes {stable_mosaic.version = 11 : i64} {
  func.func @_rows_on_lanes_kernel(%arg0: i32, %arg1: memref<20x128xf32, #tpu.memory_space<vmem>>, %arg2: memref<20x1xf32, #tpu.memory_space<vmem>>, %arg3: memref<20x1xf32, #tpu.memory_space<vmem>>, %arg4: memref<20x128xf32, #tpu.memory_space<vmem>>) attributes {dimension_semantics = [#tpu.dimension_semantics<parallel>], iteration_bounds = array<i64: 1>, scalar_prefetch = 0 : i64, scratch_operands = 0 : i64, tpu.core_type = #tpu.core_type<tc>, window_params = [{transform_indices = @transform_0, window_bounds = array<i64: 20, 128>}, {pipeline_mode = #tpu.pipeline_mode<synchronous>, transform_indices = @transform_1, window_bounds = array<i64: 20, 1>}, {pipeline_mode = #tpu.pipeline_mode<synchronous>, transform_indices = @transform_2, window_bounds = array<i64: 20, 1>}, {transform_indices = @transform_3, window_bounds = array<i64: 20, 128>}]} {
    %c0 = arith.constant 0 : index
    %c0_0 = arith.constant 0 : index
    %0 = vector.load %arg1[%c0, %c0_0] : memref<20x128xf32, #tpu.memory_space<vmem>>, vector<20x128xf32>
    %cst = arith.constant dense<0.000000e+00> : vector<128xf32>
    %1 = vector.multi_reduction <add>, %0, %cst [0] : vector<20x128xf32> to vector<128xf32>
    %2 = vector.shape_cast %1 : vector<128xf32> to vector<1x128xf32>
    %cst_1 = arith.constant 2.000000e+01 : f32
    %3 = vector.broadcast %cst_1 : f32 to vector<1x128xf32>
    %4 = arith.divf %2, %3 : vector<1x128xf32>
    %5 = vector.broadcast %4 : vector<1x128xf32> to vector<20x128xf32>
    %6 = arith.subf %0, %5 : vector<20x128xf32>
    %7 = arith.mulf %6, %6 : vector<20x128xf32>
    %cst_2 = arith.constant dense<0.000000e+00> : vector<128xf32>
    %8 = vector.multi_reduction <add>, %7, %cst_2 [0] : vector<20x128xf32> to vector<128xf32>
    %9 = vector.shape_cast %8 : vector<128xf32> to vector<1x128xf32>
    %cst_3 = arith.constant 0.0526315793 : f32
    %10 = vector.broadcast %cst_3 : f32 to vector<1x128xf32>
    %11 = arith.mulf %9, %10 : vector<1x128xf32>
    %12 = math.sqrt %11 : vector<1x128xf32>
    %cst_4 = arith.constant 9.99999997E-7 : f32
    %13 = vector.broadcast %cst_4 : f32 to vector<1x128xf32>
    %14 = arith.addf %12, %13 : vector<1x128xf32>
    %15 = tpu.reciprocal %14 : vector<1x128xf32> -> vector<1x128xf32>
    %c0_5 = arith.constant 0 : index
    %c0_6 = arith.constant 0 : index
    %16 = vector.load %arg2[%c0_5, %c0_6] : memref<20x1xf32, #tpu.memory_space<vmem>>, vector<20x1xf32>
    %c0_7 = arith.constant 0 : index
    %c0_8 = arith.constant 0 : index
    %17 = vector.load %arg3[%c0_7, %c0_8] : memref<20x1xf32, #tpu.memory_space<vmem>>, vector<20x1xf32>
    %18 = vector.broadcast %15 : vector<1x128xf32> to vector<20x128xf32>
    %19 = arith.mulf %6, %18 : vector<20x128xf32>
    %20 = vector.broadcast %16 : vector<20x1xf32> to vector<20x128xf32>
    %21 = arith.mulf %19, %20 : vector<20x128xf32>
    %22 = vector.broadcast %17 : vector<20x1xf32> to vector<20x128xf32>
    %23 = arith.addf %21, %22 : vector<20x128xf32>
    %c0_9 = arith.constant 0 : index
    %c0_10 = arith.constant 0 : index
    %24 = vector.load %arg4[%c0_9, %c0_10] : memref<20x128xf32, #tpu.memory_space<vmem>>, vector<20x128xf32>
    tpu.vector_store %arg4[%c0_9, %c0_10], %23 {strides = array<i32>} : memref<20x128xf32, #tpu.memory_space<vmem>>, vector<20x128xf32>,
    return
  }
  func.func @transform_0(%arg0: i32) -> (i32, i32) {
    %c0_i32 = arith.constant 0 : i32
    %c0_i32_0 = arith.constant 0 : i32
    return %c0_i32, %arg0 : i32, i32
  }
  func.func @transform_1(%arg0: i32) -> (i32, i32) {
    %c0_i32 = arith.constant 0 : i32
    %c0_i32_0 = arith.constant 0 : i32
    %c0_i32_1 = arith.constant 0 : i32
    return %c0_i32, %c0_i32_0 : i32, i32
  }
  func.func @transform_2(%arg0: i32) -> (i32, i32) {
    %c0_i32 = arith.constant 0 : i32
    %c0_i32_0 = arith.constant 0 : i32
    %c0_i32_1 = arith.constant 0 : i32
    return %c0_i32, %c0_i32_0 : i32, i32
  }
  func.func @transform_3(%arg0: i32) -> (i32, i32) {
    %c0_i32 = arith.constant 0 : i32
    %c0_i32_0 = arith.constant 0 : i32
    return %c0_i32, %arg0 : i32, i32
  }
}

</mosaic_0001>

<llo_original>
// kernel: tpu_custom_call.1
$region0: #{tpu_custom_call.1}
  #allocation0 [shape = 'u32[]', space=smem, size = 0x4, offset = 0x4, fixed_abs, tag = 'smem constant byte address 0x4 - core index']
  #allocation1 [shape = 'u32[72,128]{1,0:T(1,128)}', space=vmem, size = 0x9000, scoped, tag = 'internal scratch']
  %s0 = inlined_call_operand.vmem [shape: f32[20,20], index: 0, kind: input, shape index: {}]
  %s1 = inlined_call_operand.vmem [shape: f32[20,1], index: 1, kind: input, shape index: {}]
  %s2 = inlined_call_operand.vmem [shape: f32[20,1], index: 2, kind: input, shape index: {}]
  %s3 = inlined_call_operand.hbm [shape: f32[20,20], index: 3, kind: output, shape index: {}]
  %s4 = sld [smem:[#allocation0]]
  $region22: #{tpu_custom_call.1} parent=0
    _
  %s6 = ssub.s32 1, %s4
  %s7 = scalar_select 0, %s6, %s4
  $region1: #{tpu_custom_call.1} parent=0
    #allocation2 [shape = 'u8[12288]{0}', space=vmem, size = 0x3000, scoped, tag = 'output window, operand 0, single buffered']
    #allocation3 [shape = 's32[1]{0}', space=sflag, size = 0x4, scoped, tag = 'scoped memory for tpu_custom_call.1']
    %8 = vsyncpa [#allocation3], 0
    // Predicated region
    $region2: #{tpu_custom_call.1} parent=1 // pred_check
      _
    $region3: #{tpu_custom_call.1} parent=1 // pred_check_branch
      %10 = sbr.rel (0) target = $region5
    $region4: #{tpu_custom_call.1} parent=1 // pred_region
      _
    $region5: #{tpu_custom_call.1} parent=1 // pred_fallthru
      _
    // Predicated region
    $region6: #{tpu_custom_call.1} parent=1 // pred_check
      _
    $region7: #{tpu_custom_call.1} parent=1 // pred_check_branch
      %12 = sbr.rel (0) target = $region9
    $region8: #{tpu_custom_call.1} parent=1 // pred_region
      _
    $region9: #{tpu_custom_call.1} parent=1 // pred_fallthru
      _
    // Predicated region
    $region10: #{tpu_custom_call.1} parent=1 // pred_check
      _
    $region11: #{tpu_custom_call.1} parent=1 // pred_check_branch
      %14 = sbr.rel (0) target = $region13
    $region12: #{tpu_custom_call.1} parent=1 // pred_region
      _
    $region13: #{tpu_custom_call.1} parent=1 // pred_fallthru
      _
    %v15 = vld [vmem:[%s0] sm:$0xff]
    %v16 = vld [vmem:[%s0 + $0x8] sm:$0xff]
    %v17 = vld [vmem:[%s0 + $0x10] sm:$0xf]
    %v18 = vadd.f32 %v15, %v16
    %vm19 = vcmask 1043456
    %v20 = vsel %vm19, %v17, 0.0
    %v21 = vadd.f32 %v18, %v20
    %v22 = vrot.slane %v21, 4
    %v23 = vadd.f32 %v21, %v22
    %v24 = vrot.slane %v23, 2
    %v25 = vadd.f32 %v23, %v24
    %v26 = vrot.slane %v25, 1
    %v27 = vadd.f32 %v25, %v26
    %v28 = vrcp.pop 20.0
    %v29 = vmul.f32 20.0, %v28
    %v30 = vsub.f32 1.0, %v29
    %v31 = vmul.f32 %v28, %v30
    %v32 = vadd.f32 %v28, %v31
    %vm33 = vweird.f32 %v28
    %v34 = vsel %vm33, %v28, %v32
    %v35 = vmul.f32 %v27, %v34
    %v36 = vsub.f32 %v15, %v35
    %v37 = vsub.f32 %v16, %v35
    %v38 = vsub.f32 %v17, %v35
    %v39 = vmul.f32 %v36, %v36
    %v40 = vmul.f32 %v37, %v37
    %v41 = vmul.f32 %v38, %v38
    %v42 = vadd.f32 %v39, %v40
    %v43 = vsel %vm19, %v41, 0.0
    %v44 = vadd.f32 %v42, %v43
    %v45 = vrot.slane %v44, 4
    %v46 = vadd.f32 %v44, %v45
    %v47 = vrot.slane %v46, 2
    %v48 = vadd.f32 %v46, %v47
    %v49 = vrot.slane %v48, 1
    %v50 = vadd.f32 %v48, %v49
    %v51 = vmul.f32 %v50, 0.05263158
    %v52 = vrsqrt.pop %v51
    %v53 = vmul.f32 %v52, %v51
    %v54 = vmul.f32 %v53, %v52
    %v55 = vmul.f32 0.5, %v54
    %v56 = vsub.f32 1.5, %v55
    %v57 = vmul.f32 %v52, %v56
    %v58 = vmul.f32 %v51, %v57
    %vm59 = vcmp.eq.f32.partialorder %v51, inf
    %v60 = vsel %vm59, %v51, %v58
    %vm61 = vcmp.eq.f32.partialorder %v51, 0.0
    %v62 = vand.u32 %v51, 2147483648
    %v63 = vsel %vm61, %v62, %v60
    %v64 = vadd.f32 %v63, 1e-06
    %v65 = vrcp.pop %v64
    %v66 = vmul.f32 %v64, %v65
    %v67 = vsub.f32 1.0, %v66
    %v68 = vmul.f32 %v65, %v67
    %v69 = vadd.f32 %v65, %v68
    %vm70 = vweird.f32 %v64
    %vm71 = vweird.f32 %v65
    %vm72 = vmor %vm70, %vm71
    %v73 = vsel %vm72, %v65, %v69
    %v74 = vand.u32 2147483647, %v64
    %vm75 = vcmp.eq.f32.partialorder %v74, 8.507059e+37
    %v76 = vand.u32 %v64, 2147483648
    %v77 = vor.u32 1.1754944e-38, %v76
    %v78 = vsel %vm75, %v77, %v73
    %v79 = vld [vmem:[%s1] sm:$0xff]
    %v80 = vld [vmem:[%s1 + $0x8] sm:$0xff]
    %v81 = vld [vmem:[%s1 + $0x10] sm:$0xf]
    %v82 = vld [vmem:[%s2] sm:$0xff]
    %v83 = vld [vmem:[%s2 + $0x8] sm:$0xff]
    %v84 = vld [vmem:[%s2 + $0x10] sm:$0xf]
    %v85 = vmul.f32 %v36, %v78
    %v86 = vmul.f32 %v37, %v78
    %v87 = vmul.f32 %v38, %v78
    %89 = vset.pattern.permute.xlu0 0
    %90 = vperm.xlu0 %89, %v79
    %v91 = vpop.permute.xlu0 %90
    %94 = vset.pattern.permute.xlu0 0
    %95 = vperm.xlu0 %94, %v80
    %v96 = vpop.permute.xlu0 %95
    %99 = vset.pattern.permute.xlu0 0
    %100 = vperm.xlu0 %99, %v81
    %v101 = vpop.permute.xlu0 %100
    %v103 = vmul.f32 %v85, %v91
    %v104 = vmul.f32 %v86, %v96
    %v105 = vmul.f32 %v87, %v101
    %107 = vset.pattern.permute.xlu0 0
    %108 = vperm.xlu0 %107, %v82
    %v109 = vpop.permute.xlu0 %108
    %112 = vset.pattern.permute.xlu0 0
    %113 = vperm.xlu0 %112, %v83
    %v114 = vpop.permute.xlu0 %113
    %117 = vset.pattern.permute.xlu0 0
    %118 = vperm.xlu0 %117, %v84
    %v119 = vpop.permute.xlu0 %118
    %v121 = vadd.f32 %v103, %v109
    %v122 = vadd.f32 %v104, %v114
    %v123 = vadd.f32 %v105, %v119
    %124 = vst [vmem:[#allocation2] sm:$0xff] %v121
    %125 = vst [vmem:[#allocation2 + $0x8] sm:$0xff] %v122
    %126 = vst [vmem:[#allocation2 + $0x10] sm:$0xf] %v123
    // Predicated region
    $region14: #{tpu_custom_call.1} parent=1 // pred_check
      _
    $region15: #{tpu_custom_call.1} parent=1 // pred_check_branch
      %128 = sbr.rel (0) target = $region17
    $region16: #{tpu_custom_call.1} parent=1 // pred_region
      %130 = vsyncadd [#allocation3], 0
      %s131 = sshll.u32 [#allocation2], 4
      %s132 = int_to_ptr.vmem [resolvable:$true] %s131
      %s133 = sshll.u32 %s3, 4
      %s134 = int_to_ptr.hbm [resolvable:$true] %s133
      %139 = dma.vmem_to_hbm [thread:$0]  %s132, 384, %s134, [#allocation3], 128, 128, 8
    $region17: #{tpu_custom_call.1} parent=1 // pred_fallthru
      _
    // Predicated region
    $region18: #{tpu_custom_call.1} parent=1 // pred_check
      _
    $region19: #{tpu_custom_call.1} parent=1 // pred_check_branch
      %141 = sbr.rel (0) target = $region21
    $region20: #{tpu_custom_call.1} parent=1 // pred_region
      %143 = dma.done [#allocation3], 384
    $region21: #{tpu_custom_call.1} parent=1 // pred_fallthru
      _
    %144 = vsyncpa [#allocation3], 1

</llo_original>
